<compile_context>
chip_gen: v5e
topology: v5e:2x2
jax: 0.10.0
libtpu: 0.0.40
codegen_flags: <defaults>
</compile_context>

<pallas_src>
import functools

import jax
import jax.numpy as jnp
from jax.experimental import pallas as pl
from jax.experimental.pallas import tpu as pltpu

_LANES = 128
# Target bytes per input block. 4 MiB/block -> ~16 MiB VMEM with in+out
# double-buffering, safely under the 32 MiB limit requested below.
_BLOCK_BYTES = 4 * 1024 * 1024


def _activation_kernel(x_ref, o_ref, *, mode: str):
    x = x_ref[...]
    if mode == "hardswish":
        # x * relu6(x + 3) / 6
        o_ref[...] = x * jnp.clip(x + 3.0, 0.0, 6.0) * (1.0 / 6.0)
    elif mode == "GeLU":
        # torch F.gelu default is the exact (erf-based) GeLU.
        # TODO(synk): if profiling on v7x shows this mode flips to VALU-bound,
        # approximate=True (tanh -> EUP slot) is faster but changes numerics.
        o_ref[...] = jax.nn.gelu(x, approximate=False)
    elif mode == "ReLU":
        o_ref[...] = jnp.maximum(x, 0.0)
    elif mode == "ReLU2":
        o_ref[...] = x * jnp.maximum(x, 0.0)
    elif mode == "ReLU2swish":
        o_ref[...] = x * jnp.maximum(x + 3.0, 0.0)
    else:
        raise ValueError(f"Unknown activation mode: {mode}")


def _sublanes(dtype) -> int:
    # Native packed-sublane count per vreg row-group: f32 -> 8, bf16 -> 16,
    # int8/fp8 -> 32.  Keeps blocks tile-aligned without upcasting.
    return {4: 8, 2: 16, 1: 32}.get(jnp.dtype(dtype).itemsize, 8)


@functools.partial(jax.jit, static_argnames=("mode",))
def activation(x: jax.Array, mode: str = "hardswish") -> jax.Array:
    """Elementwise activation matching BitNetMCU.Activation.forward."""
    orig_shape = x.shape
    dtype = x.dtype
    total = x.size
    itemsize = jnp.dtype(dtype).itemsize
    sub = _sublanes(dtype)

    # Lane-dense 2D view; pad only to a multiple of 128 (zero padding is safe:
    # f(0) == 0 for every supported mode) and short-circuit when aligned.
    x_flat = jnp.ravel(x)
    padded = pl.cdiv(total, _LANES) * _LANES
    if padded != total:
        x_flat = jnp.pad(x_flat, (0, padded - total))
    rows = padded // _LANES
    x2d = x_flat.reshape(rows, _LANES)

    # Block sizing: multi-MiB blocks to amortize the ~0.35 us/step grid
    # overhead, sublane-aligned to the native dtype, and capped at ~half the
    # rows so the 'parallel' grid keeps >= 2 steps (both v7x TensorCores).
    target_rows = max(sub, (_BLOCK_BYTES // (_LANES * itemsize)) // sub * sub)
    if rows <= sub:
        block_rows = rows  # tiny array: one full-extent block
    else:
        half_rows = pl.cdiv(pl.cdiv(rows, 2), sub) * sub
        block_rows = min(target_rows, half_rows)
    grid = (pl.cdiv(rows, block_rows),)

    out2d = pl.pallas_call(
        functools.partial(_activation_kernel, mode=mode),
        out_shape=jax.ShapeDtypeStruct((rows, _LANES), dtype),
        grid_spec=pltpu.PrefetchScalarGridSpec(
            num_scalar_prefetch=0,
            grid=grid,
            in_specs=[pl.BlockSpec((block_rows, _LANES), lambda i: (i, 0))],
            out_specs=pl.BlockSpec((block_rows, _LANES), lambda i: (i, 0)),
        ),
        # Same shape/dtype -> reuse the intermediate slab buffer for the
        # output; saves an HBM allocation / peak footprint for large x.
        input_output_aliases={0: 0},
        compiler_params=pltpu.CompilerParams(
            dimension_semantics=("parallel",),
            vmem_limit_bytes=32 * 1024 * 1024,
        ),
    )(x2d)

    out_flat = out2d.reshape(-1)
    if padded != total:
        out_flat = out_flat[:total]
    return out_flat.reshape(orig_shape)


def _reference(x, mode):
    if mode == "hardswish":
        return x * jnp.clip(x + 3.0, 0.0, 6.0) / 6.0
    elif mode == "GeLU":
        return jax.nn.gelu(x, approximate=False)
    elif mode == "ReLU":
        return jnp.maximum(x, 0.0)
    elif mode == "ReLU2":
        return x * jnp.maximum(x, 0.0)
    elif mode == "ReLU2swish":
        return x * jnp.maximum(x + 3.0, 0.0)
    raise ValueError(mode)


if __name__ == "__main__":
    key = jax.random.PRNGKey(0)
    # NCHW input, as in the PyTorch conv convention: batch=2, channels=4, 16x16
    x = jax.random.normal(key, (2, 4, 16, 16), dtype=jnp.float32) * 3.0

    ok = True
    for mode in ("hardswish", "GeLU", "ReLU", "ReLU2", "ReLU2swish"):
        y = activation(x, mode=mode)
        jax.block_until_ready(y)
        y_ref = _reference(x, mode)
        if not jnp.allclose(y, y_ref, atol=1e-5, rtol=1e-5):
            ok = False
            print(f"MISMATCH in mode {mode}")

    if ok:
        print("KERNEL_OK")
</pallas_src>

<mosaic_0001>
module attributes {stable_mosaic.version = 11 : i64} {
  func.func @_activation_kernel(%arg0: i32, %arg1: memref<8x128xf32, #tpu.memory_space<vmem>>, %arg2: memref<8x128xf32, #tpu.memory_space<vmem>>) attributes {dimension_semantics = [#tpu.dimension_semantics<parallel>], iteration_bounds = array<i64: 2>, scalar_prefetch = 0 : i64, scratch_operands = 0 : i64, tpu.core_type = #tpu.core_type<tc>, window_params = [{transform_indices = @transform_0, window_bounds = array<i64: 8, 128>}, {transform_indices = @transform_1, window_bounds = array<i64: 8, 128>}]} {
    %c0 = arith.constant 0 : index
    %c0_0 = arith.constant 0 : index
    %0 = vector.load %arg1[%c0, %c0_0] : memref<8x128xf32, #tpu.memory_space<vmem>>, vector<8x128xf32>
    %cst = arith.constant 3.000000e+00 : f32
    %1 = vector.broadcast %cst : f32 to vector<8x128xf32>
    %2 = arith.addf %0, %1 : vector<8x128xf32>
    %cst_1 = arith.constant 0.000000e+00 : f32
    %cst_2 = arith.constant 6.000000e+00 : f32
    %3 = vector.broadcast %cst_1 : f32 to vector<8x128xf32>
    %4 = arith.maximumf %3, %2 : vector<8x128xf32>
    %5 = vector.broadcast %cst_2 : f32 to vector<8x128xf32>
    %6 = arith.minimumf %5, %4 : vector<8x128xf32>
    %7 = arith.mulf %0, %6 : vector<8x128xf32>
    %cst_3 = arith.constant 0.166666672 : f32
    %8 = vector.broadcast %cst_3 : f32 to vector<8x128xf32>
    %9 = arith.mulf %7, %8 : vector<8x128xf32>
    %c0_4 = arith.constant 0 : index
    %c0_5 = arith.constant 0 : index
    %10 = vector.load %arg2[%c0_4, %c0_5] : memref<8x128xf32, #tpu.memory_space<vmem>>, vector<8x128xf32>
    tpu.vector_store %arg2[%c0_4, %c0_5], %9 {strides = array<i32>} : memref<8x128xf32, #tpu.memory_space<vmem>>, vector<8x128xf32>,
    return
  }
  func.func @transform_0(%arg0: i32) -> (i32, i32) {
    %c0_i32 = arith.constant 0 : i32
    %c0_i32_0 = arith.constant 0 : i32
    return %arg0, %c0_i32 : i32, i32
  }
  func.func @transform_1(%arg0: i32) -> (i32, i32) {
    %c0_i32 = arith.constant 0 : i32
    %c0_i32_0 = arith.constant 0 : i32
    return %arg0, %c0_i32 : i32, i32
  }
}

</mosaic_0001>

<llo_original>
// kernel: activation.1
$region0: #{activation.1}
  #allocation0 [shape = 'u32[]', space=smem, size = 0x4, offset = 0x4, fixed_abs, tag = 'smem constant byte address 0x4 - core index']
  #allocation1 [shape = 'u32[72,128]{1,0:T(1,128)}', space=vmem, size = 0x9000, scoped, tag = 'internal scratch']
  %s0 = inlined_call_operand.vmem [shape: f32[16,128], index: 0, kind: input, shape index: {}, may-alias: {0,1}]
  %s1 = inlined_call_operand.vmem [shape: f32[16,128], index: 1, kind: output, shape index: {}, may-alias: {0,1}]
  %s2 = sld [smem:[#allocation0]]
  $region37: #{activation.1} parent=0
    _
  %s4 = ssub.s32 1, %s2
  %s5 = scalar_select 0, %s4, %s2
  loop: start=0, step=1, limit=4
  $region2: #{activation.1} parent=0 // loop_pre_header
    _
  $region3: #{activation.1} parent=0 // loop_header
    %s7 = sphi 0, %s11
    %p8 = scmp.ge.s32.totalorder %s7, 4
    %s17 = sphi 0, %s19
    %s20 = sphi 0, %s17
    %s21 = sphi 0, %s20
    %s37 = sphi 0, %s21
    %s43 = sphi 0, %s45
    %s46 = sphi 0, %s43
    %s47 = sphi 0, %s46
    %s63 = sphi 0, %s47
  $region4: #{activation.1} parent=0 // loop_header_branch
    %10 = sbr.rel (%p8) target = $region8
  $region5: #{activation.1} parent=0 // loop_body
    %s12 = ssub.s32 %s7, 1
    %s13 = ssub.s32 %s7, 2
    %s14 = sadd.s32 %s7, 1
    %s15 = ssub.s32 %s7, %s14
    %p16 = scmp.eq.s32.totalorder %s15, 0
    %s18 = sadd.s32 %s17, 1
    %s19 = scalar_select %p16, %s17, %s18
    %p22 = pneg %p16
    %p23 = scmp.eq.s32.totalorder %s7, 1
    %p24 = por %p22, %p23
    %p25 = scmp.ne.s32.totalorder %s17, %s20
    %p26 = scmp.eq.s32.totalorder %s7, 0
    %p27 = por %p25, %p26
    %p28 = scmp.ne.s32.totalorder %s17, %s20
    %p29 = scmp.eq.s32.totalorder %s12, 1
    %p30 = por %p28, %p29
    %p31 = scmp.ne.s32.totalorder %s20, %s21
    %p32 = scmp.eq.s32.totalorder %s12, 0
    %p33 = por %p31, %p32
    %p34 = scmp.ne.s32.totalorder %s20, %s21
    %p35 = scmp.eq.s32.totalorder %s13, 1
    %p36 = por %p34, %p35
    %p38 = scmp.ne.s32.totalorder %s21, %s37
    %p39 = scmp.eq.s32.totalorder %s13, 0
    %p40 = por %p38, %p39
    %s41 = ssub.s32 %s7, %s14
    %p42 = scmp.eq.s32.totalorder %s41, 0
    %s44 = sadd.s32 %s43, 1
    %s45 = scalar_select %p42, %s43, %s44
    %p48 = pneg %p42
    %p49 = scmp.eq.s32.totalorder %s7, 1
    %p50 = por %p48, %p49
    %p51 = scmp.ne.s32.totalorder %s43, %s46
    %p52 = scmp.eq.s32.totalorder %s7, 0
    %p53 = por %p51, %p52
    %p54 = scmp.ne.s32.totalorder %s43, %s46
    %p55 = scmp.eq.s32.totalorder %s12, 1
    %p56 = por %p54, %p55
    %p57 = scmp.ne.s32.totalorder %s46, %s47
    %p58 = scmp.eq.s32.totalorder %s12, 0
    %p59 = por %p57, %p58
    %p60 = scmp.ne.s32.totalorder %s46, %s47
    %p61 = scmp.eq.s32.totalorder %s13, 1
    %p62 = por %p60, %p61
    %p64 = scmp.ne.s32.totalorder %s47, %s63
    %p65 = scmp.eq.s32.totalorder %s13, 0
    %p66 = por %p64, %p65
    %p67 = scmp.le.s32.totalorder 1, %s7
    %p68 = scmp.lt.s32.totalorder %s7, 3
    %p69 = pnand %p67, %p68
    %p70 = pneg %p69
    // Predicated region
    $region9: #{activation.1} parent=5 // pred_check
      _
    $region10: #{activation.1} parent=5 // pred_check_branch
      %72 = sbr.rel (%p69) target = $region12
    $region11: #{activation.1} parent=5 // pred_region
      %s73 = ssub.s32 %s7, 1
    $region12: #{activation.1} parent=5 // pred_fallthru
      _
    %p74 = scmp.lt.s32.totalorder %s7, 2
    // Predicated region
    $region13: #{activation.1} parent=5 // pred_check
      %p75 = pneg %p74
    $region14: #{activation.1} parent=5 // pred_check_branch
      %77 = sbr.rel (%p75) target = $region16
    $region15: #{activation.1} parent=5 // pred_region
      // Predicated region
      $region17: #{activation.1} parent=15 // pred_check
        %p78 = pneg %p27
      $region18: #{activation.1} parent=15 // pred_check_branch
        %80 = sbr.rel (%p78) target = $region20
      $region19: #{activation.1} parent=15 // pred_region
        %p81 = scmp.lt.s32.totalorder %s7, 1
        %s82 = scalar_select %p81, %s7, 1
        %s83 = smul.addr %s82, 8
        %s84 = scalar_lea.vmem %s0, %s83
      $region20: #{activation.1} parent=15 // pred_fallthru
        _
    $region16: #{activation.1} parent=5 // pred_fallthru
      _
    %p85 = scmp.le.s32.totalorder 1, %s7
    %p86 = scmp.lt.s32.totalorder %s7, 3
    %p87 = pnand %p85, %p86
    %p88 = pneg %p87
    // Predicated region
    $region21: #{activation.1} parent=5 // pred_check
      _
    $region22: #{activation.1} parent=5 // pred_check_branch
      %90 = sbr.rel (%p87) target = $region24
    $region23: #{activation.1} parent=5 // pred_region
      %s91 = ssub.s32 %s7, 1
      %p92 = scmp.lt.s32.totalorder %s12, 1
      %s93 = scalar_select %p92, %s12, 1
      %s94 = smul.addr %s93, 8
      %s95 = scalar_lea.vmem %s0, %s94
      %p96 = pneg %p33
      %p97 = pneg %p30
      %p98 = pneg %p59
      %p99 = pneg %p56
      %p100 = scmp.lt.s32.totalorder %s12, 1
      %s101 = scalar_select %p100, %s12, 1
      %s102 = smul.addr %s101, 8
      %s103 = scalar_lea.vmem %s1, %s102
      %p104 = scmp.lt.s32.totalorder %s12, 1
      %s105 = scalar_select %p104, %s12, 1
      %s106 = smul.addr %s105, 8
      %s107 = scalar_lea.vmem %s0, %s106
      %p108 = scmp.lt.s32.totalorder %s12, 1
      %s109 = scalar_select %p108, %s12, 1
      %s110 = smul.addr %s109, 8
      %s111 = scalar_lea.vmem %s1, %s110
      %v112 = vld [vmem:[%s107] sm:$0xff]
      %v113 = vadd.f32 %v112, 3.0
      %v114 = vmax.f32 %v113, 0.0
      %v115 = vmin.f32 %v114, 6.0
      %v116 = vmul.f32 %v112, %v115
      %v117 = vmul.f32 %v116, 0.16666667
      %118 = vst [vmem:[%s111] sm:$0xff] %v117
      %p119 = scmp.lt.s32.totalorder %s12, 1
      %s120 = scalar_select %p119, %s12, 1
      %s121 = smul.addr %s120, 8
      %s122 = scalar_lea.vmem %s1, %s121
      // Predicated region
      $region25: #{activation.1} parent=23 // pred_check
        %p123 = pneg %p56
      $region26: #{activation.1} parent=23 // pred_check_branch
        %125 = sbr.rel (%p123) target = $region28
      $region27: #{activation.1} parent=23 // pred_region
        _
      $region28: #{activation.1} parent=23 // pred_fallthru
        _
    $region24: #{activation.1} parent=5 // pred_fallthru
      _
    %p126 = scmp.le.s32.totalorder 2, %s7
    // Predicated region
    $region29: #{activation.1} parent=5 // pred_check
      %p127 = pneg %p126
    $region30: #{activation.1} parent=5 // pred_check_branch
      %129 = sbr.rel (%p127) target = $region32
    $region31: #{activation.1} parent=5 // pred_region
      %s130 = ssub.s32 %s7, 2
      // Predicated region
      $region33: #{activation.1} parent=31 // pred_check
        %p131 = pneg %p62
      $region34: #{activation.1} parent=31 // pred_check_branch
        %133 = sbr.rel (%p131) target = $region36
      $region35: #{activation.1} parent=31 // pred_region
        %p134 = scmp.lt.s32.totalorder %s13, 1
        %s135 = scalar_select %p134, %s13, 1
        %s136 = smul.addr %s135, 8
        %s137 = scalar_lea.vmem %s1, %s136
      $region36: #{activation.1} parent=31 // pred_fallthru
        _
    $region32: #{activation.1} parent=5 // pred_fallthru
      _
  $region6: #{activation.1} parent=0 // loop_footer
    %s11 = sadd.s32 1, %s7
  $region7: #{activation.1} parent=0 // loop_footer_branch
    %6 = sbr.rel target = $region3
  $region8: #{activation.1} parent=0 // loop_exit
    _

</llo_original>
